<compile_context>
chip_gen: v6e
topology: v6e:2x2x1
jax: 0.10.0
libtpu: 0.0.40
codegen_flags: <defaults>
</compile_context>

<pallas_src>
import functools
import math

import jax
import jax.numpy as jnp
from jax.experimental import pallas as pl
from jax.experimental.pallas import tpu as pltpu


def _round_up(x, m):
    return (x + m - 1) // m * m


def _cdiv(a, b):
    return -(-a // b)


def _ffn_kernel(x_ref, w1_ref, w2_ref, o_ref, acc_ref, *, h_real):
    """One (batch_tile, d_ff_tile) grid step of LayerNorm(relu(x@W1)@W2 + x)."""
    f = pl.program_id(1)
    nf = pl.num_programs(1)

    @pl.when(f == 0)
    def _():
        acc_ref[...] = jnp.zeros_like(acc_ref)

    x = x_ref[...]                                   # (tb, Hp), input dtype (f32)
    xm = x.astype(w1_ref.dtype)                      # bf16 operands into the MXU

    # Linear(H -> tf) + ReLU.  f32 accumulation on the MXU.
    h = jnp.dot(xm, w1_ref[...], preferred_element_type=jnp.float32)
    h = jnp.maximum(h, 0.0)

    # Linear(tf -> H): partial product, accumulated over the d_ff tiles.
    acc_ref[...] += jnp.dot(h.astype(w2_ref.dtype), w2_ref[...],
                            preferred_element_type=jnp.float32)

    @pl.when(f == nf - 1)
    def _():
        # Residual add in f32, then LayerNorm(eps=1e-5, weight=1, bias=0).
        y = acc_ref[...] + x.astype(jnp.float32)
        # Padded feature columns of y are exactly zero (zero-padded x / W2),
        # so full-row sums equal sums over the h_real real columns.
        inv_n = 1.0 / h_real
        s = jnp.sum(y, axis=-1, keepdims=True)
        ss = jnp.sum(y * y, axis=-1, keepdims=True)
        mean = s * inv_n
        var = jnp.maximum(ss * inv_n - mean * mean, 0.0)
        o_ref[...] = ((y - mean) * jax.lax.rsqrt(var + 1e-5)).astype(o_ref.dtype)


def _vmem_budget_bytes():
    cap = 64 << 20                       # conservative (v7x per-TC) fallback
    try:
        info = pltpu.get_tpu_info()
        cap = int(getattr(info, "vmem_capacity_bytes", cap))
    except Exception:
        pass
    return int(cap * 0.8)                # leave compiler / internal-scratch headroom


def _vmem_estimate(tb, hp, tf, x_item, o_item, w_item, w_bufs):
    io = 2 * tb * hp * (x_item + o_item)           # double-buffered x + out
    wts = w_bufs * (hp * tf + tf * hp) * w_item    # resident W1/W2 tiles
    acc = 4 * tb * hp                              # f32 accumulator scratch
    interm = 4 * tb * tf                           # f32 hidden intermediate
    return io + wts + acc + interm


def feed_forward_net(x, w1, w2, *, block_b=512, mxu_dtype=jnp.bfloat16):
    """FeedForwardNet forward: LayerNorm(ReLU(x @ w1) @ w2 + x).

    x : (batch, 1, h_dim);  w1 : (h_dim, d_ff);  w2 : (d_ff, h_dim).
    mxu_dtype=None keeps the weights' own dtype (precise f32 path).
    """
    b, one, h_dim = x.shape
    assert one == 1
    d_ff = w1.shape[1]
    assert w1.shape == (h_dim, d_ff) and w2.shape == (d_ff, h_dim)

    x2d = x.reshape(b, h_dim)

    # MXU operand dtype: bf16 by default (fast MXU path, half the weight DMA).
    w_dtype = jnp.dtype(mxu_dtype) if mxu_dtype is not None else jnp.dtype(w1.dtype)
    w1c = w1.astype(w_dtype)
    w2c = w2.astype(w_dtype)

    # ---- lane-dense feature axis: pad h_dim to a multiple of 128 ------------
    hp = _round_up(h_dim, 128)
    if hp != h_dim:
        x2d = jnp.pad(x2d, ((0, 0), (0, hp - h_dim)))
        w1c = jnp.pad(w1c, ((0, hp - h_dim), (0, 0)))
        w2c = jnp.pad(w2c, ((0, 0), (0, hp - h_dim)))

    # ---- batch tiling: dtype-aware sublane alignment, >=2 programs when possible
    sub = max(8, 32 // x2d.dtype.itemsize)       # 8 rows/vreg for f32, 16 for bf16
    if b <= sub:
        tb = b                                   # single full-extent batch block
    else:
        tb = min(block_b, _round_up(_cdiv(b, 2), sub))
        tb = max(tb, sub)

    # ---- d_ff tiling so everything fits the per-generation VMEM budget ------
    budget = _vmem_budget_bytes()
    xi = x2d.dtype.itemsize
    oi = jnp.dtype(x.dtype).itemsize
    wi = w_dtype.itemsize
    if _vmem_estimate(tb, hp, d_ff, xi, oi, wi, w_bufs=1) <= budget:
        tf, fp = d_ff, d_ff                      # whole d_ff resident, single-buffered
    else:
        tf = 2048                                # multiples of 256 fill the v6e/v7x MXU
        while tf > 256 and _vmem_estimate(tb, hp, tf, xi, oi, wi, w_bufs=2) > budget:
            tf //= 2
        fp = _round_up(d_ff, tf)
        if fp != d_ff:                           # zero pad: relu(x@0) @ 0 contributes 0
            w1c = jnp.pad(w1c, ((0, 0), (0, fp - d_ff)))
            w2c = jnp.pad(w2c, ((0, fp - d_ff), (0, 0)))
    nf = fp // tf

    # If even the smallest d_ff tile is too big, shrink the batch tile.
    while tb > sub and _vmem_estimate(tb, hp, tf, xi, oi, wi,
                                      1 if nf == 1 else 2) > budget:
        tb = max(sub, (tb // 2 // sub) * sub)
    nb = _cdiv(b, tb)                            # partial last block is boundary-masked

    kernel = functools.partial(_ffn_kernel, h_real=h_dim)
    cost = pl.CostEstimate(
        flops=4 * b * h_dim * d_ff,
        transcendentals=b,
        bytes_accessed=int(x2d.size * xi + b * hp * oi
                           + w1c.size * wi + w2c.size * wi),
    )

    def build(weight_pipeline_mode):
        wkw = ({} if weight_pipeline_mode is None
               else {"pipeline_mode": weight_pipeline_mode})
        return pl.pallas_call(
            kernel,
            out_shape=jax.ShapeDtypeStruct((b, hp), x.dtype),
            grid_spec=pltpu.PrefetchScalarGridSpec(
                num_scalar_prefetch=0,
                grid=(nb, nf),
                in_specs=[
                    pl.BlockSpec((tb, hp), lambda i, f: (i, 0)),
                    pl.BlockSpec((hp, tf), lambda i, f: (0, f), **wkw),
                    pl.BlockSpec((tf, hp), lambda i, f: (f, 0), **wkw),
                ],
                out_specs=pl.BlockSpec((tb, hp), lambda i, f: (i, 0)),
                scratch_shapes=[pltpu.VMEM((tb, hp), jnp.float32)],
            ),
            compiler_params=pltpu.CompilerParams(
                dimension_semantics=("parallel", "arbitrary"),
                vmem_limit_bytes=budget,
            ),
            cost_estimate=cost,
        )

    # Weights are grid-invariant when nf == 1: single-buffer them (nothing to
    # prefetch -> half the weight VMEM).  Fall back if Buffered(1) is rejected.
    if nf == 1:
        try:
            out2d = jax.block_until_ready(build(pl.Buffered(1))(x2d, w1c, w2c))
        except Exception:
            out2d = build(None)(x2d, w1c, w2c)
    else:
        out2d = build(None)(x2d, w1c, w2c)

    if hp != h_dim:
        out2d = out2d[:, :h_dim]
    return out2d.reshape(b, 1, h_dim)


def _reference(x, w1, w2):
    h = jnp.maximum(x @ w1, 0.0)
    y = h @ w2 + x
    mean = jnp.mean(y, axis=-1, keepdims=True)
    var = jnp.mean((y - mean) ** 2, axis=-1, keepdims=True)
    return (y - mean) * jax.lax.rsqrt(var + 1e-5)


if __name__ == "__main__":
    h_dim, d_ff = 32, 64

    key = jax.random.PRNGKey(0)
    kx, k1, k2, kx2 = jax.random.split(key, 4)

    # Deterministic init (uniform ~ PyTorch Linear default scale), stored as
    # (in_features, out_features).
    bound1 = 1.0 / math.sqrt(h_dim)
    bound2 = 1.0 / math.sqrt(d_ff)
    w1 = jax.random.uniform(k1, (h_dim, d_ff), jnp.float32, -bound1, bound1)
    w2 = jax.random.uniform(k2, (d_ff, h_dim), jnp.float32, -bound2, bound2)

    # Case 1: module-shaped input (batch, 1, h_dim), precise f32 MXU path.
    batch = 2
    x = jax.random.normal(kx, (batch, 1, h_dim), jnp.float32)
    out_f32 = feed_forward_net(x, w1, w2, mxu_dtype=None)
    jax.block_until_ready(out_f32)
    ref = _reference(x, w1, w2)
    assert out_f32.shape == (batch, 1, h_dim)
    assert jnp.allclose(out_f32, ref, atol=1e-4, rtol=1e-4), \
        float(jnp.max(jnp.abs(out_f32 - ref)))

    # Case 2: default bf16-MXU fast path (looser tolerance vs the f32 reference).
    out_bf = feed_forward_net(x, w1, w2)
    jax.block_until_ready(out_bf)
    assert jnp.allclose(out_bf, ref, atol=3e-2, rtol=3e-2), \
        float(jnp.max(jnp.abs(out_bf - ref)))

    # Case 3: batch-tiled path with a boundary-masked (ragged) last tile.
    batch2 = 10
    x2 = jax.random.normal(kx2, (batch2, 1, h_dim), jnp.float32)
    out2 = feed_forward_net(x2, w1, w2, block_b=8)
    jax.block_until_ready(out2)
    ref2 = _reference(x2, w1, w2)
    assert out2.shape == (batch2, 1, h_dim)
    assert jnp.allclose(out2, ref2, atol=3e-2, rtol=3e-2), \
        float(jnp.max(jnp.abs(out2 - ref2)))

    print("KERNEL_OK")
</pallas_src>

<mosaic_0001>
module attributes {stable_mosaic.version = 11 : i64} {
  func.func @_ffn_kernel(%arg0: i32, %arg1: i32, %arg2: memref<2x128xf32, #tpu.memory_space<vmem>>, %arg3: memref<128x64xf32, #tpu.memory_space<vmem>>, %arg4: memref<64x128xf32, #tpu.memory_space<vmem>>, %arg5: memref<2x128xf32, #tpu.memory_space<vmem>>, %arg6: memref<2x128xf32, #tpu.memory_space<vmem>>) attributes {dimension_semantics = [#tpu.dimension_semantics<parallel>, #tpu.dimension_semantics<arbitrary>], iteration_bounds = array<i64: 1, 1>, scalar_prefetch = 0 : i64, scratch_operands = 1 : i64, tpu.core_type = #tpu.core_type<tc>, window_params = [{transform_indices = @transform_0, window_bounds = array<i64: 2, 128>}, {pipeline_mode = #tpu.pipeline_mode<synchronous>, transform_indices = @transform_1, window_bounds = array<i64: 128, 64>}, {pipeline_mode = #tpu.pipeline_mode<synchronous>, transform_indices = @transform_2, window_bounds = array<i64: 64, 128>}, {transform_indices = @transform_3, window_bounds = array<i64: 2, 128>}]} {
    %c0_i32 = arith.constant 0 : i32
    %0 = arith.cmpi eq, %arg1, %c0_i32 : i32
    %1 = arith.extui %0 : i1 to i32
    %c0_i32_0 = arith.constant 0 : i32
    %2 = arith.cmpi ne, %1, %c0_i32_0 : i32
    scf.if %2 {
      %cst_14 = arith.constant 0.000000e+00 : f32
      %16 = vector.broadcast %cst_14 : f32 to vector<2x128xf32>
      %c0_15 = arith.constant 0 : index
      %c0_16 = arith.constant 0 : index
      %17 = vector.load %arg6[%c0_15, %c0_16] : memref<2x128xf32, #tpu.memory_space<vmem>>, vector<2x128xf32>
      tpu.vector_store %arg6[%c0_15, %c0_16], %16 {strides = array<i32>} : memref<2x128xf32, #tpu.memory_space<vmem>>, vector<2x128xf32>,
    } else {
    }
    %c0 = arith.constant 0 : index
    %c0_1 = arith.constant 0 : index
    %3 = vector.load %arg2[%c0, %c0_1] : memref<2x128xf32, #tpu.memory_space<vmem>>, vector<2x128xf32>
    %c0_2 = arith.constant 0 : index
    %c0_3 = arith.constant 0 : index
    %4 = vector.load %arg3[%c0_2, %c0_3] : memref<128x64xf32, #tpu.memory_space<vmem>>, vector<128x64xf32>
    %cst = arith.constant dense<0.000000e+00> : vector<2x64xf32>
    %5 = tpu.matmul %3, %4, %cst {dimension_numbers = #tpu.dot_dimension_numbers<[1], [0], [0], [1], [0, 0, 1, 1], [], []>} : vector<2x128xf32>, vector<128x64xf32>, vector<2x64xf32> -> vector<2x64xf32>
    %cst_4 = arith.constant 0.000000e+00 : f32
    %6 = vector.broadcast %cst_4 : f32 to vector<2x64xf32>
    %7 = arith.maximumf %5, %6 : vector<2x64xf32>
    %c0_5 = arith.constant 0 : index
    %c0_6 = arith.constant 0 : index
    %8 = vector.load %arg6[%c0_5, %c0_6] : memref<2x128xf32, #tpu.memory_space<vmem>>, vector<2x128xf32>
    %c0_7 = arith.constant 0 : index
    %c0_8 = arith.constant 0 : index
    %9 = vector.load %arg4[%c0_7, %c0_8] : memref<64x128xf32, #tpu.memory_space<vmem>>, vector<64x128xf32>
    %cst_9 = arith.constant dense<0.000000e+00> : vector<2x128xf32>
    %10 = tpu.matmul %7, %9, %cst_9 {dimension_numbers = #tpu.dot_dimension_numbers<[1], [0], [0], [1], [0, 0, 1, 1], [], []>} : vector<2x64xf32>, vector<64x128xf32>, vector<2x128xf32> -> vector<2x128xf32>
    %11 = arith.addf %8, %10 : vector<2x128xf32>
    %c0_10 = arith.constant 0 : index
    %c0_11 = arith.constant 0 : index
    %12 = vector.load %arg6[%c0_10, %c0_11] : memref<2x128xf32, #tpu.memory_space<vmem>>, vector<2x128xf32>
    tpu.vector_store %arg6[%c0_10, %c0_11], %11 {strides = array<i32>} : memref<2x128xf32, #tpu.memory_space<vmem>>, vector<2x128xf32>,
    %c0_i32_12 = arith.constant 0 : i32
    %13 = arith.cmpi eq, %arg1, %c0_i32_12 : i32
    %14 = arith.extui %13 : i1 to i32
    %c0_i32_13 = arith.constant 0 : i32
    %15 = arith.cmpi ne, %14, %c0_i32_13 : i32
    scf.if %15 {
      %c0_14 = arith.constant 0 : index
      %c0_15 = arith.constant 0 : index
      %16 = vector.load %arg6[%c0_14, %c0_15] : memref<2x128xf32, #tpu.memory_space<vmem>>, vector<2x128xf32>
      %17 = arith.addf %16, %3 : vector<2x128xf32>
      %cst_16 = arith.constant dense<0.000000e+00> : vector<2xf32>
      %18 = vector.multi_reduction <add>, %17, %cst_16 [1] : vector<2x128xf32> to vector<2xf32>
      %19 = vector.shape_cast %18 : vector<2xf32> to vector<2x1xf32>
      %20 = arith.mulf %17, %17 : vector<2x128xf32>
      %cst_17 = arith.constant dense<0.000000e+00> : vector<2xf32>
      %21 = vector.multi_reduction <add>, %20, %cst_17 [1] : vector<2x128xf32> to vector<2xf32>
      %22 = vector.shape_cast %21 : vector<2xf32> to vector<2x1xf32>
      %cst_18 = arith.constant 3.125000e-02 : f32
      %23 = vector.broadcast %cst_18 : f32 to vector<2x1xf32>
      %24 = arith.mulf %19, %23 : vector<2x1xf32>
      %cst_19 = arith.constant 3.125000e-02 : f32
      %25 = vector.broadcast %cst_19 : f32 to vector<2x1xf32>
      %26 = arith.mulf %22, %25 : vector<2x1xf32>
      %27 = arith.mulf %24, %24 : vector<2x1xf32>
      %28 = arith.subf %26, %27 : vector<2x1xf32>
      %cst_20 = arith.constant 0.000000e+00 : f32
      %29 = vector.broadcast %cst_20 : f32 to vector<2x1xf32>
      %30 = arith.maximumf %28, %29 : vector<2x1xf32>
      %31 = vector.broadcast %24 : vector<2x1xf32> to vector<2x128xf32>
      %32 = arith.subf %17, %31 : vector<2x128xf32>
      %cst_21 = arith.constant 9.99999974E-6 : f32
      %33 = vector.broadcast %cst_21 : f32 to vector<2x1xf32>
      %34 = arith.addf %30, %33 : vector<2x1xf32>
      %35 = math.rsqrt %34 : vector<2x1xf32>
      %36 = vector.broadcast %35 : vector<2x1xf32> to vector<2x128xf32>
      %37 = arith.mulf %32, %36 : vector<2x128xf32>
      %c0_22 = arith.constant 0 : index
      %c0_23 = arith.constant 0 : index
      %38 = vector.load %arg5[%c0_22, %c0_23] : memref<2x128xf32, #tpu.memory_space<vmem>>, vector<2x128xf32>
      tpu.vector_store %arg5[%c0_22, %c0_23], %37 {strides = array<i32>} : memref<2x128xf32, #tpu.memory_space<vmem>>, vector<2x128xf32>,
    } else {
    }
    return
  }
  func.func @transform_0(%arg0: i32, %arg1: i32) -> (i32, i32) {
    %c0_i32 = arith.constant 0 : i32
    %c0_i32_0 = arith.constant 0 : i32
    return %arg0, %c0_i32 : i32, i32
  }
  func.func @transform_1(%arg0: i32, %arg1: i32) -> (i32, i32) {
    %c0_i32 = arith.constant 0 : i32
    %c0_i32_0 = arith.constant 0 : i32
    return %c0_i32, %arg1 : i32, i32
  }
  func.func @transform_2(%arg0: i32, %arg1: i32) -> (i32, i32) {
    %c0_i32 = arith.constant 0 : i32
    %c0_i32_0 = arith.constant 0 : i32
    return %arg1, %c0_i32 : i32, i32
  }
  func.func @transform_3(%arg0: i32, %arg1: i32) -> (i32, i32) {
    %c0_i32 = arith.constant 0 : i32
    %c0_i32_0 = arith.constant 0 : i32
    return %arg0, %c0_i32 : i32, i32
  }
}

module attributes {stable_mosaic.version = 11 : i64} {
  func.func @_ffn_kernel(%arg0: i32, %arg1: i32, %arg2: memref<2x128xf32, #tpu.memory_space<vmem>>, %arg3: memref<128x64xf32, #tpu.memory_space<vmem>>, %arg4: memref<64x128xf32, #tpu.memory_space<vmem>>, %arg5: memref<2x128xf32, #tpu.memory_space<vmem>>, %arg6: memref<2x128xf32, #tpu.memory_space<vmem>>) attributes {dimension_semantics = [#tpu.dimension_semantics<parallel>, #tpu.dimension_semantics<arbitrary>], iteration_bounds = array<i64: 1, 1>, scalar_prefetch = 0 : i64, scratch_operands = 1 : i64, tpu.core_type = #tpu.core_type<tc>, window_params = [{transform_indices = @transform_0, window_bounds = array<i64: 2, 128>}, {transform_indices = @transform_1, window_bounds = array<i64: 128, 64>}, {transform_indices = @transform_2, window_bounds = array<i64: 64, 128>}, {transform_indices = @transform_3, window_bounds = array<i64: 2, 128>}]} {
    %c0_i32 = arith.constant 0 : i32
    %0 = arith.cmpi eq, %arg1, %c0_i32 : i32
    %1 = arith.extui %0 : i1 to i32
    %c0_i32_0 = arith.constant 0 : i32
    %2 = arith.cmpi ne, %1, %c0_i32_0 : i32
    scf.if %2 {
      %cst_14 = arith.constant 0.000000e+00 : f32
      %16 = vector.broadcast %cst_14 : f32 to vector<2x128xf32>
      %c0_15 = arith.constant 0 : index
      %c0_16 = arith.constant 0 : index
      %17 = vector.load %arg6[%c0_15, %c0_16] : memref<2x128xf32, #tpu.memory_space<vmem>>, vector<2x128xf32>
      tpu.vector_store %arg6[%c0_15, %c0_16], %16 {strides = array<i32>} : memref<2x128xf32, #tpu.memory_space<vmem>>, vector<2x128xf32>,
    } else {
    }
    %c0 = arith.constant 0 : index
    %c0_1 = arith.constant 0 : index
    %3 = vector.load %arg2[%c0, %c0_1] : memref<2x128xf32, #tpu.memory_space<vmem>>, vector<2x128xf32>
    %c0_2 = arith.constant 0 : index
    %c0_3 = arith.constant 0 : index
    %4 = vector.load %arg3[%c0_2, %c0_3] : memref<128x64xf32, #tpu.memory_space<vmem>>, vector<128x64xf32>
    %cst = arith.constant dense<0.000000e+00> : vector<2x64xf32>
    %5 = tpu.matmul %3, %4, %cst {dimension_numbers = #tpu.dot_dimension_numbers<[1], [0], [0], [1], [0, 0, 1, 1], [], []>} : vector<2x128xf32>, vector<128x64xf32>, vector<2x64xf32> -> vector<2x64xf32>
    %cst_4 = arith.constant 0.000000e+00 : f32
    %6 = vector.broadcast %cst_4 : f32 to vector<2x64xf32>
    %7 = arith.maximumf %5, %6 : vector<2x64xf32>
    %c0_5 = arith.constant 0 : index
    %c0_6 = arith.constant 0 : index
    %8 = vector.load %arg6[%c0_5, %c0_6] : memref<2x128xf32, #tpu.memory_space<vmem>>, vector<2x128xf32>
    %c0_7 = arith.constant 0 : index
    %c0_8 = arith.constant 0 : index
    %9 = vector.load %arg4[%c0_7, %c0_8] : memref<64x128xf32, #tpu.memory_space<vmem>>, vector<64x128xf32>
    %cst_9 = arith.constant dense<0.000000e+00> : vector<2x128xf32>
    %10 = tpu.matmul %7, %9, %cst_9 {dimension_numbers = #tpu.dot_dimension_numbers<[1], [0], [0], [1], [0, 0, 1, 1], [], []>} : vector<2x64xf32>, vector<64x128xf32>, vector<2x128xf32> -> vector<2x128xf32>
    %11 = arith.addf %8, %10 : vector<2x128xf32>
    %c0_10 = arith.constant 0 : index
    %c0_11 = arith.constant 0 : index
    %12 = vector.load %arg6[%c0_10, %c0_11] : memref<2x128xf32, #tpu.memory_space<vmem>>, vector<2x128xf32>
    tpu.vector_store %arg6[%c0_10, %c0_11], %11 {strides = array<i32>} : memref<2x128xf32, #tpu.memory_space<vmem>>, vector<2x128xf32>,
    %c0_i32_12 = arith.constant 0 : i32
    %13 = arith.cmpi eq, %arg1, %c0_i32_12 : i32
    %14 = arith.extui %13 : i1 to i32
    %c0_i32_13 = arith.constant 0 : i32
    %15 = arith.cmpi ne, %14, %c0_i32_13 : i32
    scf.if %15 {
      %c0_14 = arith.constant 0 : index
      %c0_15 = arith.constant 0 : index
      %16 = vector.load %arg6[%c0_14, %c0_15] : memref<2x128xf32, #tpu.memory_space<vmem>>, vector<2x128xf32>
      %17 = arith.addf %16, %3 : vector<2x128xf32>
      %cst_16 = arith.constant dense<0.000000e+00> : vector<2xf32>
      %18 = vector.multi_reduction <add>, %17, %cst_16 [1] : vector<2x128xf32> to vector<2xf32>
      %19 = vector.shape_cast %18 : vector<2xf32> to vector<2x1xf32>
      %20 = arith.mulf %17, %17 : vector<2x128xf32>
      %cst_17 = arith.constant dense<0.000000e+00> : vector<2xf32>
      %21 = vector.multi_reduction <add>, %20, %cst_17 [1] : vector<2x128xf32> to vector<2xf32>
      %22 = vector.shape_cast %21 : vector<2xf32> to vector<2x1xf32>
      %cst_18 = arith.constant 3.125000e-02 : f32
      %23 = vector.broadcast %cst_18 : f32 to vector<2x1xf32>
      %24 = arith.mulf %19, %23 : vector<2x1xf32>
      %cst_19 = arith.constant 3.125000e-02 : f32
      %25 = vector.broadcast %cst_19 : f32 to vector<2x1xf32>
      %26 = arith.mulf %22, %25 : vector<2x1xf32>
      %27 = arith.mulf %24, %24 : vector<2x1xf32>
      %28 = arith.subf %26, %27 : vector<2x1xf32>
      %cst_20 = arith.constant 0.000000e+00 : f32
      %29 = vector.broadcast %cst_20 : f32 to vector<2x1xf32>
      %30 = arith.maximumf %28, %29 : vector<2x1xf32>
      %31 = vector.broadcast %24 : vector<2x1xf32> to vector<2x128xf32>
      %32 = arith.subf %17, %31 : vector<2x128xf32>
      %cst_21 = arith.constant 9.99999974E-6 : f32
      %33 = vector.broadcast %cst_21 : f32 to vector<2x1xf32>
      %34 = arith.addf %30, %33 : vector<2x1xf32>
      %35 = math.rsqrt %34 : vector<2x1xf32>
      %36 = vector.broadcast %35 : vector<2x1xf32> to vector<2x128xf32>
      %37 = arith.mulf %32, %36 : vector<2x128xf32>
      %c0_22 = arith.constant 0 : index
      %c0_23 = arith.constant 0 : index
      %38 = vector.load %arg5[%c0_22, %c0_23] : memref<2x128xf32, #tpu.memory_space<vmem>>, vector<2x128xf32>
      tpu.vector_store %arg5[%c0_22, %c0_23], %37 {strides = array<i32>} : memref<2x128xf32, #tpu.memory_space<vmem>>, vector<2x128xf32>,
    } else {
    }
    return
  }
  func.func @transform_0(%arg0: i32, %arg1: i32) -> (i32, i32) {
    %c0_i32 = arith.constant 0 : i32
    %c0_i32_0 = arith.constant 0 : i32
    return %arg0, %c0_i32 : i32, i32
  }
  func.func @transform_1(%arg0: i32, %arg1: i32) -> (i32, i32) {
    %c0_i32 = arith.constant 0 : i32
    %c0_i32_0 = arith.constant 0 : i32
    return %c0_i32, %arg1 : i32, i32
  }
  func.func @transform_2(%arg0: i32, %arg1: i32) -> (i32, i32) {
    %c0_i32 = arith.constant 0 : i32
    %c0_i32_0 = arith.constant 0 : i32
    return %arg1, %c0_i32 : i32, i32
  }
  func.func @transform_3(%arg0: i32, %arg1: i32) -> (i32, i32) {
    %c0_i32 = arith.constant 0 : i32
    %c0_i32_0 = arith.constant 0 : i32
    return %arg0, %c0_i32 : i32, i32
  }
}

</mosaic_0001>

<llo_original>
// kernel: tpu_custom_call.1
$region0: #{tpu_custom_call.1}
  #allocation0 [shape = 'u32[]', space=smem, size = 0x4, offset = 0x4, fixed_abs, tag = 'smem constant byte address 0x4 - core index']
  #allocation1 [shape = 'u32[144,128]{1,0:T(1,128)}', space=vmem, size = 0x12000, scoped, tag = 'internal scratch']
  #allocation2 [shape = 'f32[2,128]{1,0:T(2,128)}', space=vmem, size = 0x400, scoped, tag = 'scratch operand']
  %s0 = inlined_call_operand.vmem [shape: f32[2,128], index: 0, kind: input, shape index: {}]
  %s1 = inlined_call_operand.vmem [shape: f32[128,64], index: 1, kind: input, shape index: {}]
  %s2 = inlined_call_operand.vmem [shape: f32[64,128], index: 2, kind: input, shape index: {}]
  %s3 = inlined_call_operand.hbm [shape: f32[2,128], index: 3, kind: output, shape index: {}]
  %s4 = sld [smem:[#allocation0]]
  $region30: #{tpu_custom_call.1} parent=0
    _
  %s6 = ssub.s32 1, %s4
  %s7 = scalar_select 0, %s6, %s4
  $region1: #{tpu_custom_call.1} parent=0
    #allocation3 [shape = 'u8[1024]{0}', space=vmem, size = 0x400, scoped, tag = 'output window, operand 0, single buffered']
    #allocation4 [shape = 's32[1]{0}', space=sflag, size = 0x4, scoped, tag = 'scoped memory for tpu_custom_call.1']
    %8 = vsyncpa [#allocation4], 0
    // Predicated region
    $region2: #{tpu_custom_call.1} parent=1 // pred_check
      _
    $region3: #{tpu_custom_call.1} parent=1 // pred_check_branch
      %10 = sbr.rel (0) target = $region5
    $region4: #{tpu_custom_call.1} parent=1 // pred_region
      _
    $region5: #{tpu_custom_call.1} parent=1 // pred_fallthru
      _
    // Predicated region
    $region6: #{tpu_custom_call.1} parent=1 // pred_check
      _
    $region7: #{tpu_custom_call.1} parent=1 // pred_check_branch
      %12 = sbr.rel (0) target = $region9
    $region8: #{tpu_custom_call.1} parent=1 // pred_region
      _
    $region9: #{tpu_custom_call.1} parent=1 // pred_fallthru
      _
    // Predicated region
    $region10: #{tpu_custom_call.1} parent=1 // pred_check
      _
    $region11: #{tpu_custom_call.1} parent=1 // pred_check_branch
      %14 = sbr.rel (0) target = $region13
    $region12: #{tpu_custom_call.1} parent=1 // pred_region
      _
    $region13: #{tpu_custom_call.1} parent=1 // pred_fallthru
      _
    %p15 = scmp.eq.s32.totalorder 0, 0
    // Predicated region
    $region14: #{tpu_custom_call.1} parent=1 // pred_check
      %p16 = pneg %p15
    $region15: #{tpu_custom_call.1} parent=1 // pred_check_branch
      %18 = sbr.rel (%p16) target = $region17
    $region16: #{tpu_custom_call.1} parent=1 // pred_region
      %19 = vst [vmem:[#allocation2] sm:$0x3] 0.0
    $region17: #{tpu_custom_call.1} parent=1 // pred_fallthru
      _
    %v20 = vld [vmem:[%s0] sm:$0x3]
    %v21 = vld [vmem:[%s1] sm:$0xff]
    %v22 = vld [vmem:[%s1 + $0x8] sm:$0xff]
    %v23 = vld [vmem:[%s1 + $0x10] sm:$0xff]
    %v24 = vld [vmem:[%s1 + $0x18] sm:$0xff]
    %v25 = vld [vmem:[%s1 + $0x20] sm:$0xff]
    %v26 = vld [vmem:[%s1 + $0x28] sm:$0xff]
    %v27 = vld [vmem:[%s1 + $0x30] sm:$0xff]
    %v28 = vld [vmem:[%s1 + $0x38] sm:$0xff]
    %v29 = vld [vmem:[%s1 + $0x40] sm:$0xff]
    %v30 = vld [vmem:[%s1 + $0x48] sm:$0xff]
    %v31 = vld [vmem:[%s1 + $0x50] sm:$0xff]
    %v32 = vld [vmem:[%s1 + $0x58] sm:$0xff]
    %v33 = vld [vmem:[%s1 + $0x60] sm:$0xff]
    %v34 = vld [vmem:[%s1 + $0x68] sm:$0xff]
    %v35 = vld [vmem:[%s1 + $0x70] sm:$0xff]
    %v36 = vld [vmem:[%s1 + $0x78] sm:$0xff]
    %37 = vmatprep.subr.mxu0 0.0
    %38 = vmatpush1.msra.mxu0 %v36
    %39 = vmatprep.subr.mxu0 0.0
    %40 = vmatpush1.msra.mxu0 %v35
    %41 = vmatprep.subr.mxu0 0.0
    %42 = vmatpush1.msra.mxu0 %v34
    %43 = vmatprep.subr.mxu0 0.0
    %44 = vmatpush1.msra.mxu0 %v33
    %45 = vmatprep.subr.mxu0 0.0
    %46 = vmatpush1.msra.mxu0 %v32
    %47 = vmatprep.subr.mxu0 0.0
    %48 = vmatpush1.msra.mxu0 %v31
    %49 = vmatprep.subr.mxu0 0.0
    %50 = vmatpush1.msra.mxu0 %v30
    %51 = vmatprep.subr.mxu0 0.0
    %52 = vmatpush1.msra.mxu0 %v29
    %53 = vmatprep.subr.mxu0 0.0
    %54 = vmatpush1.msra.mxu0 %v28
    %55 = vmatprep.subr.mxu0 0.0
    %56 = vmatpush1.msra.mxu0 %v27
    %57 = vmatprep.subr.mxu0 0.0
    %58 = vmatpush1.msra.mxu0 %v26
    %59 = vmatprep.subr.mxu0 0.0
    %60 = vmatpush1.msra.mxu0 %v25
    %61 = vmatprep.subr.mxu0 0.0
    %62 = vmatpush1.msra.mxu0 %v24
    %63 = vmatprep.subr.mxu0 0.0
    %64 = vmatpush1.msra.mxu0 %v23
    %65 = vmatprep.subr.mxu0 0.0
    %66 = vmatpush1.msra.mxu0 %v22
    %67 = vmatprep.subr.mxu0 0.0
    %68 = vmatpush1.msra.mxu0 %v21
    %69 = vmatprep.subr.mxu0 0.0
    %70 = vmatpush2.msra.mxu0 0.0
    %71 = vmatprep.subr.mxu0 0.0
    %72 = vmatpush2.msra.mxu0 0.0
    %73 = vmatprep.subr.mxu0 0.0
    %74 = vmatpush2.msra.mxu0 0.0
    %75 = vmatprep.subr.mxu0 0.0
    %76 = vmatpush2.msra.mxu0 0.0
    %77 = vmatprep.subr.mxu0 0.0
    %78 = vmatpush2.msra.mxu0 0.0
    %79 = vmatprep.subr.mxu0 0.0
    %80 = vmatpush2.msra.mxu0 0.0
    %81 = vmatprep.subr.mxu0 0.0
    %82 = vmatpush2.msra.mxu0 0.0
    %83 = vmatprep.subr.mxu0 0.0
    %84 = vmatpush2.msra.mxu0 0.0
    %85 = vmatprep.subr.mxu0 0.0
    %86 = vmatpush2.msra.mxu0 0.0
    %87 = vmatprep.subr.mxu0 0.0
    %88 = vmatpush2.msra.mxu0 0.0
    %89 = vmatprep.subr.mxu0 0.0
    %90 = vmatpush2.msra.mxu0 0.0
    %91 = vmatprep.subr.mxu0 0.0
    %92 = vmatpush2.msra.mxu0 0.0
    %93 = vmatprep.subr.mxu0 0.0
    %94 = vmatpush2.msra.mxu0 0.0
    %95 = vmatprep.subr.mxu0 0.0
    %96 = vmatpush2.msra.mxu0 0.0
    %97 = vmatprep.subr.mxu0 0.0
    %98 = vmatpush2.msra.mxu0 0.0
    %99 = vmatprep.subr.mxu0 0.0
    %100 = vmatpush2.msra.mxu0 0.0
    %101 = vmatprep.mubr.f32.mxu0 0.0
    %102 = vmatmul.mubr.f32.gmra.mxu0 %v20
    %v103 = vpop.f32.mrf.mxu0
    %v104 = vadd.f32 0.0, %v103
    %v105 = vpop.f32.mrf.mxu0
    %106 = vdwg.mxu0
    %v107 = vmax.f32 %v104, 0.0
    %v108 = vld [vmem:[#allocation2] sm:$0x3]
    %v109 = vld [vmem:[%s2] sm:$0xff]
    %v110 = vld [vmem:[%s2 + $0x8] sm:$0xff]
    %v111 = vld [vmem:[%s2 + $0x10] sm:$0xff]
    %v112 = vld [vmem:[%s2 + $0x18] sm:$0xff]
    %v113 = vld [vmem:[%s2 + $0x20] sm:$0xff]
    %v114 = vld [vmem:[%s2 + $0x28] sm:$0xff]
    %v115 = vld [vmem:[%s2 + $0x30] sm:$0xff]
    %v116 = vld [vmem:[%s2 + $0x38] sm:$0xff]
    %vm117 = vcmask 523264
    %v119 = vsel %vm117, %v107, 0
    %121 = vmatprep.subr.mxu0 0.0
    %122 = vmatpush1.msra.mxu0 0.0
    %123 = vmatprep.subr.mxu0 0.0
    %124 = vmatpush1.msra.mxu0 0.0
    %125 = vmatprep.subr.mxu0 0.0
    %126 = vmatpush1.msra.mxu0 0.0
    %127 = vmatprep.subr.mxu0 0.0
    %128 = vmatpush1.msra.mxu0 0.0
    %129 = vmatprep.subr.mxu0 0.0
    %130 = vmatpush1.msra.mxu0 0.0
    %131 = vmatprep.subr.mxu0 0.0
    %132 = vmatpush1.msra.mxu0 0.0
    %133 = vmatprep.subr.mxu0 0.0
    %134 = vmatpush1.msra.mxu0 0.0
    %135 = vmatprep.subr.mxu0 0.0
    %136 = vmatpush1.msra.mxu0 0.0
    %137 = vmatprep.subr.mxu0 0.0
    %138 = vmatpush1.msra.mxu0 %v116
    %139 = vmatprep.subr.mxu0 0.0
    %140 = vmatpush1.msra.mxu0 %v115
    %141 = vmatprep.subr.mxu0 0.0
    %142 = vmatpush1.msra.mxu0 %v114
    %143 = vmatprep.subr.mxu0 0.0
    %144 = vmatpush1.msra.mxu0 %v113
    %145 = vmatprep.subr.mxu0 0.0
    %146 = vmatpush1.msra.mxu0 %v112
    %147 = vmatprep.subr.mxu0 0.0
    %148 = vmatpush1.msra.mxu0 %v111
    %149 = vmatprep.subr.mxu0 0.0
    %150 = vmatpush1.msra.mxu0 %v110
    %151 = vmatprep.subr.mxu0 0.0
    %152 = vmatpush1.msra.mxu0 %v109
    %153 = vmatprep.subr.mxu0 0.0
    %154 = vmatpush2.msra.mxu0 0.0
    %155 = vmatprep.subr.mxu0 0.0
    %156 = vmatpush2.msra.mxu0 0.0
    %157 = vmatprep.subr.mxu0 0.0
    %158 = vmatpush2.msra.mxu0 0.0
    %159 = vmatprep.subr.mxu0 0.0
    %160 = vmatpush2.msra.mxu0 0.0
    %161 = vmatprep.subr.mxu0 0.0
    %162 = vmatpush2.msra.mxu0 0.0
    %163 = vmatprep.subr.mxu0 0.0
    %164 = vmatpush2.msra.mxu0 0.0
    %165 = vmatprep.subr.mxu0 0.0
    %166 = vmatpush2.msra.mxu0 0.0
    %167 = vmatprep.subr.mxu0 0.0
    %168 = vmatpush2.msra.mxu0 0.0
    %169 = vmatprep.subr.mxu0 0.0
    %170 = vmatpush2.msra.mxu0 0.0
    %171 = vmatprep.subr.mxu0 0.0
    %172 = vmatpush2.msra.mxu0 0.0
    %173 = vmatprep.subr.mxu0 0.0
    %174 = vmatpush2.msra.mxu0 0.0
    %175 = vmatprep.subr.mxu0 0.0
    %176 = vmatpush2.msra.mxu0 0.0
    %177 = vmatprep.subr.mxu0 0.0
    %178 = vmatpush2.msra.mxu0 0.0
    %179 = vmatprep.subr.mxu0 0.0
    %180 = vmatpush2.msra.mxu0 0.0
    %181 = vmatprep.subr.mxu0 0.0
    %182 = vmatpush2.msra.mxu0 0.0
    %183 = vmatprep.subr.mxu0 0.0
    %184 = vmatpush2.msra.mxu0 0.0
    %185 = vmatprep.mubr.f32.mxu0 0.0
    %186 = vmatmul.mubr.f32.gmra.mxu0 %v119
    %v187 = vpop.f32.mrf.mxu0
    %v188 = vadd.f32 0.0, %v187
    %v189 = vpop.f32.mrf.mxu0
    %190 = vdwg.mxu0
    %v191 = vadd.f32 %v108, %v188
    %192 = vst [vmem:[#allocation2] sm:$0x3] %v191
    // Predicated region
    $region18: #{tpu_custom_call.1} parent=1 // pred_check
      %p193 = pneg %p15
    $region19: #{tpu_custom_call.1} parent=1 // pred_check_branch
      %195 = sbr.rel (%p193) target = $region21
    $region20: #{tpu_custom_call.1} parent=1 // pred_region
      %v196 = vld [vmem:[#allocation2] sm:$0x3]
      %v197 = vadd.f32 %v196, %v20
      %vm198 = vcmask 1041408
      %v199 = vsel %vm198, %v197, 0.0
      %200 = vadd.xlane.f32.xlu0 %v199
      %v201 = vpop.xlane.xlu0 %200
      %v202 = vmul.f32 %v197, %v197
      %v203 = vsel %vm198, %v202, 0.0
      %204 = vadd.xlane.f32.xlu0 %v203
      %v205 = vpop.xlane.xlu0 %204
      %v206 = vmul.f32 %v201, 0.03125
      %v207 = vmul.f32 %v205, 0.03125
      %v208 = vmul.f32 %v206, %v206
      %v209 = vsub.f32 %v207, %v208
      %v210 = vmax.f32 %v209, 0.0
      %v211 = vsub.f32 %v197, %v206
      %v212 = vadd.f32 %v210, 1e-05
      %v213 = vrsqrt.pop %v212
      %v214 = vmul.f32 %v211, %v213
      %215 = vst [vmem:[#allocation3] sm:$0x3] %v214
    $region21: #{tpu_custom_call.1} parent=1 // pred_fallthru
      _
    // Predicated region
    $region22: #{tpu_custom_call.1} parent=1 // pred_check
      _
    $region23: #{tpu_custom_call.1} parent=1 // pred_check_branch
      %217 = sbr.rel (0) target = $region25
    $region24: #{tpu_custom_call.1} parent=1 // pred_region
      %s219 = ssub.s32 32, 32
      %220 = vsyncadd [#allocation4], %s219
      %s222 = sshll.u32 [#allocation3], 4
      %s223 = int_to_ptr.vmem [resolvable:$true] %s222
      %225 = dma.vmem_to_hbm [thread:$0]  %s223, 32, %s3, [#allocation4]
    $region25: #{tpu_custom_call.1} parent=1 // pred_fallthru
      _
    // Predicated region
    $region26: #{tpu_custom_call.1} parent=1 // pred_check
      _
    $region27: #{tpu_custom_call.1} parent=1 // pred_check_branch
      %227 = sbr.rel (0) target = $region29
    $region28: #{tpu_custom_call.1} parent=1 // pred_region
      %228 = dma.done [#allocation4], 32
    $region29: #{tpu_custom_call.1} parent=1 // pred_fallthru
      _
    %229 = vsyncpa [#allocation4], 1

// kernel: tpu_custom_call.1
$region0: #{tpu_custom_call.1}
  #allocation0 [shape = 'u32[]', space=smem, size = 0x4, offset = 0x4, fixed_abs, tag = 'smem constant byte address 0x4 - core index']
  #allocation1 [shape = 'u32[144,128]{1,0:T(1,128)}', space=vmem, size = 0x12000, scoped, tag = 'internal scratch']
  #allocation2 [shape = 'f32[2,128]{1,0:T(2,128)}', space=vmem, size = 0x400, scoped, tag = 'scratch operand']
  %s0 = inlined_call_operand.vmem [shape: f32[2,128], index: 0, kind: input, shape index: {}]
  %s1 = inlined_call_operand.vmem [shape: f32[128,64], index: 1, kind: input, shape index: {}]
  %s2 = inlined_call_operand.vmem [shape: f32[64,128], index: 2, kind: input, shape index: {}]
  %s3 = inlined_call_operand.hbm [shape: f32[2,128], index: 3, kind: output, shape index: {}]
  %s4 = sld [smem:[#allocation0]]
  $region30: #{tpu_custom_call.1} parent=0
    _
  %s6 = ssub.s32 1, %s4
  %s7 = scalar_select 0, %s6, %s4
  $region1: #{tpu_custom_call.1} parent=0
    #allocation3 [shape = 'u8[1024]{0}', space=vmem, size = 0x400, scoped, tag = 'output window, operand 0, single buffered']
    #allocation4 [shape = 's32[1]{0}', space=sflag, size = 0x4, scoped, tag = 'scoped memory for tpu_custom_call.1']
    %8 = vsyncpa [#allocation4], 0
    // Predicated region
    $region2: #{tpu_custom_call.1} parent=1 // pred_check
      _
    $region3: #{tpu_custom_call.1} parent=1 // pred_check_branch
      %10 = sbr.rel (0) target = $region5
    $region4: #{tpu_custom_call.1} parent=1 // pred_region
      _
    $region5: #{tpu_custom_call.1} parent=1 // pred_fallthru
      _
    // Predicated region
    $region6: #{tpu_custom_call.1} parent=1 // pred_check
      _
    $region7: #{tpu_custom_call.1} parent=1 // pred_check_branch
      %12 = sbr.rel (0) target = $region9
    $region8: #{tpu_custom_call.1} parent=1 // pred_region
      _
    $region9: #{tpu_custom_call.1} parent=1 // pred_fallthru
      _
    // Predicated region
    $region10: #{tpu_custom_call.1} parent=1 // pred_check
      _
    $region11: #{tpu_custom_call.1} parent=1 // pred_check_branch
      %14 = sbr.rel (0) target = $region13
    $region12: #{tpu_custom_call.1} parent=1 // pred_region
      _
    $region13: #{tpu_custom_call.1} parent=1 // pred_fallthru
      _
    %p15 = scmp.eq.s32.totalorder 0, 0
    // Predicated region
    $region14: #{tpu_custom_call.1} parent=1 // pred_check
      %p16 = pneg %p15
    $region15: #{tpu_custom_call.1} parent=1 // pred_check_branch
      %18 = sbr.rel (%p16) target = $region17
    $region16: #{tpu_custom_call.1} parent=1 // pred_region
      %19 = vst [vmem:[#allocation2] sm:$0x3] 0.0
    $region17: #{tpu_custom_call.1} parent=1 // pred_fallthru
      _
    %v20 = vld [vmem:[%s0] sm:$0x3]
    %v21 = vld [vmem:[%s1] sm:$0xff]
    %v22 = vld [vmem:[%s1 + $0x8] sm:$0xff]
    %v23 = vld [vmem:[%s1 + $0x10] sm:$0xff]
    %v24 = vld [vmem:[%s1 + $0x18] sm:$0xff]
    %v25 = vld [vmem:[%s1 + $0x20] sm:$0xff]
    %v26 = vld [vmem:[%s1 + $0x28] sm:$0xff]
    %v27 = vld [vmem:[%s1 + $0x30] sm:$0xff]
    %v28 = vld [vmem:[%s1 + $0x38] sm:$0xff]
    %v29 = vld [vmem:[%s1 + $0x40] sm:$0xff]
    %v30 = vld [vmem:[%s1 + $0x48] sm:$0xff]
    %v31 = vld [vmem:[%s1 + $0x50] sm:$0xff]
    %v32 = vld [vmem:[%s1 + $0x58] sm:$0xff]
    %v33 = vld [vmem:[%s1 + $0x60] sm:$0xff]
    %v34 = vld [vmem:[%s1 + $0x68] sm:$0xff]
    %v35 = vld [vmem:[%s1 + $0x70] sm:$0xff]
    %v36 = vld [vmem:[%s1 + $0x78] sm:$0xff]
    %37 = vmatprep.subr.mxu0 0.0
    %38 = vmatpush1.msra.mxu0 %v36
    %39 = vmatprep.subr.mxu0 0.0
    %40 = vmatpush1.msra.mxu0 %v35
    %41 = vmatprep.subr.mxu0 0.0
    %42 = vmatpush1.msra.mxu0 %v34
    %43 = vmatprep.subr.mxu0 0.0
    %44 = vmatpush1.msra.mxu0 %v33
    %45 = vmatprep.subr.mxu0 0.0
    %46 = vmatpush1.msra.mxu0 %v32
    %47 = vmatprep.subr.mxu0 0.0
    %48 = vmatpush1.msra.mxu0 %v31
    %49 = vmatprep.subr.mxu0 0.0
    %50 = vmatpush1.msra.mxu0 %v30
    %51 = vmatprep.subr.mxu0 0.0
    %52 = vmatpush1.msra.mxu0 %v29
    %53 = vmatprep.subr.mxu0 0.0
    %54 = vmatpush1.msra.mxu0 %v28
    %55 = vmatprep.subr.mxu0 0.0
    %56 = vmatpush1.msra.mxu0 %v27
    %57 = vmatprep.subr.mxu0 0.0
    %58 = vmatpush1.msra.mxu0 %v26
    %59 = vmatprep.subr.mxu0 0.0
    %60 = vmatpush1.msra.mxu0 %v25
    %61 = vmatprep.subr.mxu0 0.0
    %62 = vmatpush1.msra.mxu0 %v24
    %63 = vmatprep.subr.mxu0 0.0
    %64 = vmatpush1.msra.mxu0 %v23
    %65 = vmatprep.subr.mxu0 0.0
    %66 = vmatpush1.msra.mxu0 %v22
    %67 = vmatprep.subr.mxu0 0.0
    %68 = vmatpush1.msra.mxu0 %v21
    %69 = vmatprep.subr.mxu0 0.0
    %70 = vmatpush2.msra.mxu0 0.0
    %71 = vmatprep.subr.mxu0 0.0
    %72 = vmatpush2.msra.mxu0 0.0
    %73 = vmatprep.subr.mxu0 0.0
    %74 = vmatpush2.msra.mxu0 0.0
    %75 = vmatprep.subr.mxu0 0.0
    %76 = vmatpush2.msra.mxu0 0.0
    %77 = vmatprep.subr.mxu0 0.0
    %78 = vmatpush2.msra.mxu0 0.0
    %79 = vmatprep.subr.mxu0 0.0
    %80 = vmatpush2.msra.mxu0 0.0
    %81 = vmatprep.subr.mxu0 0.0
    %82 = vmatpush2.msra.mxu0 0.0
    %83 = vmatprep.subr.mxu0 0.0
    %84 = vmatpush2.msra.mxu0 0.0
    %85 = vmatprep.subr.mxu0 0.0
    %86 = vmatpush2.msra.mxu0 0.0
    %87 = vmatprep.subr.mxu0 0.0
    %88 = vmatpush2.msra.mxu0 0.0
    %89 = vmatprep.subr.mxu0 0.0
    %90 = vmatpush2.msra.mxu0 0.0
    %91 = vmatprep.subr.mxu0 0.0
    %92 = vmatpush2.msra.mxu0 0.0
    %93 = vmatprep.subr.mxu0 0.0
    %94 = vmatpush2.msra.mxu0 0.0
    %95 = vmatprep.subr.mxu0 0.0
    %96 = vmatpush2.msra.mxu0 0.0
    %97 = vmatprep.subr.mxu0 0.0
    %98 = vmatpush2.msra.mxu0 0.0
    %99 = vmatprep.subr.mxu0 0.0
    %100 = vmatpush2.msra.mxu0 0.0
    %101 = vmatprep.mubr.f32.mxu0 0.0
    %102 = vmatmul.mubr.f32.gmra.mxu0 %v20
    %v103 = vpop.f32.mrf.mxu0
    %v104 = vadd.f32 0.0, %v103
    %v105 = vpop.f32.mrf.mxu0
    %106 = vdwg.mxu0
    %v107 = vmax.f32 %v104, 0.0
    %v108 = vld [vmem:[#allocation2] sm:$0x3]
    %v109 = vld [vmem:[%s2] sm:$0xff]
    %v110 = vld [vmem:[%s2 + $0x8] sm:$0xff]
    %v111 = vld [vmem:[%s2 + $0x10] sm:$0xff]
    %v112 = vld [vmem:[%s2 + $0x18] sm:$0xff]
    %v113 = vld [vmem:[%s2 + $0x20] sm:$0xff]
    %v114 = vld [vmem:[%s2 + $0x28] sm:$0xff]
    %v115 = vld [vmem:[%s2 + $0x30] sm:$0xff]
    %v116 = vld [vmem:[%s2 + $0x38] sm:$0xff]
    %vm117 = vcmask 523264
    %v119 = vsel %vm117, %v107, 0
    %121 = vmatprep.subr.mxu0 0.0
    %122 = vmatpush1.msra.mxu0 0.0
    %123 = vmatprep.subr.mxu0 0.0
    %124 = vmatpush1.msra.mxu0 0.0
    %125 = vmatprep.subr.mxu0 0.0
    %126 = vmatpush1.msra.mxu0 0.0
    %127 = vmatprep.subr.mxu0 0.0
    %128 = vmatpush1.msra.mxu0 0.0
    %129 = vmatprep.subr.mxu0 0.0
    %130 = vmatpush1.msra.mxu0 0.0
    %131 = vmatprep.subr.mxu0 0.0
    %132 = vmatpush1.msra.mxu0 0.0
    %133 = vmatprep.subr.mxu0 0.0
    %134 = vmatpush1.msra.mxu0 0.0
    %135 = vmatprep.subr.mxu0 0.0
    %136 = vmatpush1.msra.mxu0 0.0
    %137 = vmatprep.subr.mxu0 0.0
    %138 = vmatpush1.msra.mxu0 %v116
    %139 = vmatprep.subr.mxu0 0.0
    %140 = vmatpush1.msra.mxu0 %v115
    %141 = vmatprep.subr.mxu0 0.0
    %142 = vmatpush1.msra.mxu0 %v114
    %143 = vmatprep.subr.mxu0 0.0
    %144 = vmatpush1.msra.mxu0 %v113
    %145 = vmatprep.subr.mxu0 0.0
    %146 = vmatpush1.msra.mxu0 %v112
    %147 = vmatprep.subr.mxu0 0.0
    %148 = vmatpush1.msra.mxu0 %v111
    %149 = vmatprep.subr.mxu0 0.0
    %150 = vmatpush1.msra.mxu0 %v110
    %151 = vmatprep.subr.mxu0 0.0
    %152 = vmatpush1.msra.mxu0 %v109
    %153 = vmatprep.subr.mxu0 0.0
    %154 = vmatpush2.msra.mxu0 0.0
    %155 = vmatprep.subr.mxu0 0.0
    %156 = vmatpush2.msra.mxu0 0.0
    %157 = vmatprep.subr.mxu0 0.0
    %158 = vmatpush2.msra.mxu0 0.0
    %159 = vmatprep.subr.mxu0 0.0
    %160 = vmatpush2.msra.mxu0 0.0
    %161 = vmatprep.subr.mxu0 0.0
    %162 = vmatpush2.msra.mxu0 0.0
    %163 = vmatprep.subr.mxu0 0.0
    %164 = vmatpush2.msra.mxu0 0.0
    %165 = vmatprep.subr.mxu0 0.0
    %166 = vmatpush2.msra.mxu0 0.0
    %167 = vmatprep.subr.mxu0 0.0
    %168 = vmatpush2.msra.mxu0 0.0
    %169 = vmatprep.subr.mxu0 0.0
    %170 = vmatpush2.msra.mxu0 0.0
    %171 = vmatprep.subr.mxu0 0.0
    %172 = vmatpush2.msra.mxu0 0.0
    %173 = vmatprep.subr.mxu0 0.0
    %174 = vmatpush2.msra.mxu0 0.0
    %175 = vmatprep.subr.mxu0 0.0
    %176 = vmatpush2.msra.mxu0 0.0
    %177 = vmatprep.subr.mxu0 0.0
    %178 = vmatpush2.msra.mxu0 0.0
    %179 = vmatprep.subr.mxu0 0.0
    %180 = vmatpush2.msra.mxu0 0.0
    %181 = vmatprep.subr.mxu0 0.0
    %182 = vmatpush2.msra.mxu0 0.0
    %183 = vmatprep.subr.mxu0 0.0
    %184 = vmatpush2.msra.mxu0 0.0
    %185 = vmatprep.mubr.f32.mxu0 0.0
    %186 = vmatmul.mubr.f32.gmra.mxu0 %v119
    %v187 = vpop.f32.mrf.mxu0
    %v188 = vadd.f32 0.0, %v187
    %v189 = vpop.f32.mrf.mxu0
    %190 = vdwg.mxu0
    %v191 = vadd.f32 %v108, %v188
    %192 = vst [vmem:[#allocation2] sm:$0x3] %v191
    // Predicated region
    $region18: #{tpu_custom_call.1} parent=1 // pred_check
      %p193 = pneg %p15
    $region19: #{tpu_custom_call.1} parent=1 // pred_check_branch
      %195 = sbr.rel (%p193) target = $region21
    $region20: #{tpu_custom_call.1} parent=1 // pred_region
      %v196 = vld [vmem:[#allocation2] sm:$0x3]
      %v197 = vadd.f32 %v196, %v20
      %vm198 = vcmask 1041408
      %v199 = vsel %vm198, %v197, 0.0
      %200 = vadd.xlane.f32.xlu0 %v199
      %v201 = vpop.xlane.xlu0 %200
      %v202 = vmul.f32 %v197, %v197
      %v203 = vsel %vm198, %v202, 0.0
      %204 = vadd.xlane.f32.xlu0 %v203
      %v205 = vpop.xlane.xlu0 %204
      %v206 = vmul.f32 %v201, 0.03125
      %v207 = vmul.f32 %v205, 0.03125
      %v208 = vmul.f32 %v206, %v206
      %v209 = vsub.f32 %v207, %v208
      %v210 = vmax.f32 %v209, 0.0
      %v211 = vsub.f32 %v197, %v206
      %v212 = vadd.f32 %v210, 1e-05
      %v213 = vrsqrt.pop %v212
      %v214 = vmul.f32 %v211, %v213
      %215 = vst [vmem:[#allocation3] sm:$0x3] %v214
    $region21: #{tpu_custom_call.1} parent=1 // pred_fallthru
      _
    // Predicated region
    $region22: #{tpu_custom_call.1} parent=1 // pred_check
      _
    $region23: #{tpu_custom_call.1} parent=1 // pred_check_branch
      %217 = sbr.rel (0) target = $region25
    $region24: #{tpu_custom_call.1} parent=1 // pred_region
      %s219 = ssub.s32 32, 32
      %220 = vsyncadd [#allocation4], %s219
      %s222 = sshll.u32 [#allocation3], 4
      %s223 = int_to_ptr.vmem [resolvable:$true] %s222
      %225 = dma.vmem_to_hbm [thread:$0]  %s223, 32, %s3, [#allocation4]
    $region25: #{tpu_custom_call.1} parent=1 // pred_fallthru
      _
    // Predicated region
    $region26: #{tpu_custom_call.1} parent=1 // pred_check
      _
    $region27: #{tpu_custom_call.1} parent=1 // pred_check_branch
      %227 = sbr.rel (0) target = $region29
    $region28: #{tpu_custom_call.1} parent=1 // pred_region
      %228 = dma.done [#allocation4], 32
    $region29: #{tpu_custom_call.1} parent=1 // pred_fallthru
      _
    %229 = vsyncpa [#allocation4], 1

</llo_original>
